<compile_context>
chip_gen: v6e
topology: v6e:2x2x1
jax: 0.10.0
libtpu: 0.0.40
codegen_flags: <defaults>
</compile_context>

<pallas_src>
import math

import jax
import jax.numpy as jnp
from jax.experimental import pallas as pl
from jax.experimental.pallas import tpu as pltpu


# ----------------------------- Pallas kernel ------------------------------

def _encoder_kernel(x_ref, w0_ref, b0_ref, w1_ref, b1_ref, w2_ref, b2_ref, o_ref):
    # Fused Linear -> ReLU -> Linear -> ReLU -> Linear -> ReLU on one row tile.
    h = jnp.maximum(
        jnp.dot(x_ref[...], w0_ref[...], preferred_element_type=jnp.float32)
        + b0_ref[...], 0.0)
    h = jnp.maximum(
        jnp.dot(h, w1_ref[...], preferred_element_type=jnp.float32)
        + b1_ref[...], 0.0)
    o_ref[...] = jnp.maximum(
        jnp.dot(h, w2_ref[...], preferred_element_type=jnp.float32)
        + b2_ref[...], 0.0)


# ----------------------------- wrapper ------------------------------

_LANE = 128
_SINGLE_STEP_MAX_ROWS = 2048   # below this, one grid step (overhead-bound regime)
_LARGE_TM = 1024               # row tile for large M (sweep-recommended 512-2048)


def encoder_forward(x, params):
    """Encoder.forward: x [..., D_in] -> [..., D_out], fused 3-layer MLP."""
    w0, b0, w1, b1, w2, b2 = params
    s = x.shape
    d_in = s[-1]
    d_h = w0.shape[1]
    d_out = w2.shape[1]

    m = math.prod(s[:-1])
    x2 = x.reshape(m, d_in)
    if x2.dtype != jnp.float32:
        x2 = x2.astype(jnp.float32)   # no extra HBM pass when already f32

    # Lane-dense output: pad the last layer to a multiple of 128 output columns so the
    # final store is an unmasked full-lane vst.  Zero columns are free on the MXU
    # (it already burns a full 128-lane pass) and relu(0) = 0 keeps them zero.
    d_out_p = ((d_out + _LANE - 1) // _LANE) * _LANE
    if d_out_p != d_out:
        w2p = jnp.pad(w2, ((0, 0), (0, d_out_p - d_out)))
        b2p = jnp.pad(b2, ((0, 0), (0, d_out_p - d_out)))
    else:
        w2p, b2p = w2, b2

    # Row tiling: single step when the whole problem fits one tile, else large tiles.
    tm = m if m <= _SINGLE_STEP_MAX_ROWS else _LARGE_TM
    grid_m = pl.cdiv(m, tm)   # ragged tail handled by Pallas boundary-block masking

    # Megacore split only pays once each core gets several steps to pipeline.
    semantics = ("parallel",) if grid_m >= 8 else ("arbitrary",)

    const = lambda i: (0, 0)  # weights/biases: same block every step -> VMEM-resident
    out = pl.pallas_call(
        _encoder_kernel,
        out_shape=jax.ShapeDtypeStruct((m, d_out_p), jnp.float32),
        grid=(grid_m,),
        in_specs=[
            pl.BlockSpec((tm, d_in), lambda i: (i, 0)),   # streamed row tile of x
            pl.BlockSpec((d_in, d_h), const),
            pl.BlockSpec((1, d_h), const),
            pl.BlockSpec((d_h, d_h), const),
            pl.BlockSpec((1, d_h), const),
            pl.BlockSpec((d_h, d_out_p), const),
            pl.BlockSpec((1, d_out_p), const),
        ],
        out_specs=pl.BlockSpec((tm, d_out_p), lambda i: (i, 0)),
        compiler_params=pltpu.CompilerParams(dimension_semantics=semantics),
    )(x2, w0, b0, w1, b1, w2p, b2p)

    if d_out_p != d_out:
        out = out[:, :d_out]
    return out.reshape(*s[:-1], d_out)


# ----------------------------- parameter init ------------------------------

def _init_linear(key, din, dout):
    # Mirrors torch.nn.Linear default init: U(-1/sqrt(fan_in), 1/sqrt(fan_in)).
    kw, kb = jax.random.split(key)
    bound = 1.0 / (din ** 0.5)
    w = jax.random.uniform(kw, (din, dout), jnp.float32, -bound, bound)
    b = jax.random.uniform(kb, (1, dout), jnp.float32, -bound, bound)
    return w, b


def init_encoder_params(key, input_size, hidden_size, output_size):
    k0, k1, k2 = jax.random.split(key, 3)
    w0, b0 = _init_linear(k0, input_size, hidden_size)
    w1, b1 = _init_linear(k1, hidden_size, hidden_size)
    w2, b2 = _init_linear(k2, hidden_size, output_size)
    return (w0, b0, w1, b1, w2, b2)


# ----------------------------- reference (pure JAX) ------------------------------

def encoder_reference(x, params):
    w0, b0, w1, b1, w2, b2 = params
    s = x.shape
    x2 = x.reshape(-1, s[-1])
    h = jnp.maximum(x2 @ w0 + b0, 0.0)
    h = jnp.maximum(h @ w1 + b1, 0.0)
    y = jnp.maximum(h @ w2 + b2, 0.0)
    return y.reshape(*s[:-1], w2.shape[1])


# ----------------------------- main ------------------------------

if __name__ == "__main__":
    # Shapes consistent with how Encoder is used in the GNN (particle encoder):
    # batch=2, n_particles=100, input_dim=10, hidden=32, output=32.
    B, N, D_IN, D_H, D_OUT = 2, 100, 10, 32, 32

    key = jax.random.PRNGKey(0)
    kp, kx = jax.random.split(key)

    params = init_encoder_params(kp, D_IN, D_H, D_OUT)
    x = jax.random.normal(kx, (B, N, D_IN), jnp.float32)

    y = encoder_forward(x, params)
    jax.block_until_ready(y)

    assert y.shape == (B, N, D_OUT)
    y_ref = encoder_reference(x, params)
    assert jnp.allclose(y, y_ref, atol=1e-5, rtol=1e-5), "mismatch vs JAX reference"

    print("KERNEL_OK")
</pallas_src>

<mosaic_0001>
module attributes {stable_mosaic.version = 11 : i64} {
  func.func @_encoder_kernel(%arg0: i32, %arg1: memref<200x10xf32, #tpu.memory_space<vmem>>, %arg2: memref<10x32xf32, #tpu.memory_space<vmem>>, %arg3: memref<1x32xf32, #tpu.memory_space<vmem>>, %arg4: memref<32x32xf32, #tpu.memory_space<vmem>>, %arg5: memref<1x32xf32, #tpu.memory_space<vmem>>, %arg6: memref<32x128xf32, #tpu.memory_space<vmem>>, %arg7: memref<1x128xf32, #tpu.memory_space<vmem>>, %arg8: memref<200x128xf32, #tpu.memory_space<vmem>>) attributes {dimension_semantics = [#tpu.dimension_semantics<arbitrary>], iteration_bounds = array<i64: 1>, scalar_prefetch = 0 : i64, scratch_operands = 0 : i64, tpu.core_type = #tpu.core_type<tc>, window_params = [{transform_indices = @transform_0, window_bounds = array<i64: 200, 10>}, {pipeline_mode = #tpu.pipeline_mode<synchronous>, transform_indices = @transform_1, window_bounds = array<i64: 10, 32>}, {pipeline_mode = #tpu.pipeline_mode<synchronous>, transform_indices = @transform_2, window_bounds = array<i64: 1, 32>}, {pipeline_mode = #tpu.pipeline_mode<synchronous>, transform_indices = @transform_3, window_bounds = array<i64: 32, 32>}, {pipeline_mode = #tpu.pipeline_mode<synchronous>, transform_indices = @transform_4, window_bounds = array<i64: 1, 32>}, {pipeline_mode = #tpu.pipeline_mode<synchronous>, transform_indices = @transform_5, window_bounds = array<i64: 32, 128>}, {pipeline_mode = #tpu.pipeline_mode<synchronous>, transform_indices = @transform_6, window_bounds = array<i64: 1, 128>}, {transform_indices = @transform_7, window_bounds = array<i64: 200, 128>}]} {
    %c0 = arith.constant 0 : index
    %c0_0 = arith.constant 0 : index
    %0 = vector.load %arg1[%c0, %c0_0] : memref<200x10xf32, #tpu.memory_space<vmem>>, vector<200x10xf32>
    %c0_1 = arith.constant 0 : index
    %c0_2 = arith.constant 0 : index
    %1 = vector.load %arg2[%c0_1, %c0_2] : memref<10x32xf32, #tpu.memory_space<vmem>>, vector<10x32xf32>
    %cst = arith.constant dense<0.000000e+00> : vector<200x32xf32>
    %2 = tpu.matmul %0, %1, %cst {dimension_numbers = #tpu.dot_dimension_numbers<[1], [0], [0], [1], [0, 0, 1, 1], [], []>} : vector<200x10xf32>, vector<10x32xf32>, vector<200x32xf32> -> vector<200x32xf32>
    %c0_3 = arith.constant 0 : index
    %c0_4 = arith.constant 0 : index
    %3 = vector.load %arg3[%c0_3, %c0_4] : memref<1x32xf32, #tpu.memory_space<vmem>>, vector<1x32xf32>
    %4 = vector.broadcast %3 : vector<1x32xf32> to vector<200x32xf32>
    %5 = arith.addf %2, %4 : vector<200x32xf32>
    %cst_5 = arith.constant 0.000000e+00 : f32
    %6 = vector.broadcast %cst_5 : f32 to vector<200x32xf32>
    %7 = arith.maximumf %5, %6 : vector<200x32xf32>
    %c0_6 = arith.constant 0 : index
    %c0_7 = arith.constant 0 : index
    %8 = vector.load %arg4[%c0_6, %c0_7] : memref<32x32xf32, #tpu.memory_space<vmem>>, vector<32x32xf32>
    %cst_8 = arith.constant dense<0.000000e+00> : vector<200x32xf32>
    %9 = tpu.matmul %7, %8, %cst_8 {dimension_numbers = #tpu.dot_dimension_numbers<[1], [0], [0], [1], [0, 0, 1, 1], [], []>} : vector<200x32xf32>, vector<32x32xf32>, vector<200x32xf32> -> vector<200x32xf32>
    %c0_9 = arith.constant 0 : index
    %c0_10 = arith.constant 0 : index
    %10 = vector.load %arg5[%c0_9, %c0_10] : memref<1x32xf32, #tpu.memory_space<vmem>>, vector<1x32xf32>
    %11 = vector.broadcast %10 : vector<1x32xf32> to vector<200x32xf32>
    %12 = arith.addf %9, %11 : vector<200x32xf32>
    %cst_11 = arith.constant 0.000000e+00 : f32
    %13 = vector.broadcast %cst_11 : f32 to vector<200x32xf32>
    %14 = arith.maximumf %12, %13 : vector<200x32xf32>
    %c0_12 = arith.constant 0 : index
    %c0_13 = arith.constant 0 : index
    %15 = vector.load %arg6[%c0_12, %c0_13] : memref<32x128xf32, #tpu.memory_space<vmem>>, vector<32x128xf32>
    %cst_14 = arith.constant dense<0.000000e+00> : vector<200x128xf32>
    %16 = tpu.matmul %14, %15, %cst_14 {dimension_numbers = #tpu.dot_dimension_numbers<[1], [0], [0], [1], [0, 0, 1, 1], [], []>} : vector<200x32xf32>, vector<32x128xf32>, vector<200x128xf32> -> vector<200x128xf32>
    %c0_15 = arith.constant 0 : index
    %c0_16 = arith.constant 0 : index
    %17 = vector.load %arg7[%c0_15, %c0_16] : memref<1x128xf32, #tpu.memory_space<vmem>>, vector<1x128xf32>
    %18 = vector.broadcast %17 : vector<1x128xf32> to vector<200x128xf32>
    %19 = arith.addf %16, %18 : vector<200x128xf32>
    %cst_17 = arith.constant 0.000000e+00 : f32
    %20 = vector.broadcast %cst_17 : f32 to vector<200x128xf32>
    %21 = arith.maximumf %19, %20 : vector<200x128xf32>
    %c0_18 = arith.constant 0 : index
    %c0_19 = arith.constant 0 : index
    %22 = vector.load %arg8[%c0_18, %c0_19] : memref<200x128xf32, #tpu.memory_space<vmem>>, vector<200x128xf32>
    tpu.vector_store %arg8[%c0_18, %c0_19], %21 {strides = array<i32>} : memref<200x128xf32, #tpu.memory_space<vmem>>, vector<200x128xf32>,
    return
  }
  func.func @transform_0(%arg0: i32) -> (i32, i32) {
    %c0_i32 = arith.constant 0 : i32
    %c0_i32_0 = arith.constant 0 : i32
    return %arg0, %c0_i32 : i32, i32
  }
  func.func @transform_1(%arg0: i32) -> (i32, i32) {
    %c0_i32 = arith.constant 0 : i32
    %c0_i32_0 = arith.constant 0 : i32
    %c0_i32_1 = arith.constant 0 : i32
    return %c0_i32, %c0_i32_0 : i32, i32
  }
  func.func @transform_2(%arg0: i32) -> (i32, i32) {
    %c0_i32 = arith.constant 0 : i32
    %c0_i32_0 = arith.constant 0 : i32
    %c0_i32_1 = arith.constant 0 : i32
    return %c0_i32, %c0_i32_0 : i32, i32
  }
  func.func @transform_3(%arg0: i32) -> (i32, i32) {
    %c0_i32 = arith.constant 0 : i32
    %c0_i32_0 = arith.constant 0 : i32
    %c0_i32_1 = arith.constant 0 : i32
    return %c0_i32, %c0_i32_0 : i32, i32
  }
  func.func @transform_4(%arg0: i32) -> (i32, i32) {
    %c0_i32 = arith.constant 0 : i32
    %c0_i32_0 = arith.constant 0 : i32
    %c0_i32_1 = arith.constant 0 : i32
    return %c0_i32, %c0_i32_0 : i32, i32
  }
  func.func @transform_5(%arg0: i32) -> (i32, i32) {
    %c0_i32 = arith.constant 0 : i32
    %c0_i32_0 = arith.constant 0 : i32
    %c0_i32_1 = arith.constant 0 : i32
    return %c0_i32, %c0_i32_0 : i32, i32
  }
  func.func @transform_6(%arg0: i32) -> (i32, i32) {
    %c0_i32 = arith.constant 0 : i32
    %c0_i32_0 = arith.constant 0 : i32
    %c0_i32_1 = arith.constant 0 : i32
    return %c0_i32, %c0_i32_0 : i32, i32
  }
  func.func @transform_7(%arg0: i32) -> (i32, i32) {
    %c0_i32 = arith.constant 0 : i32
    %c0_i32_0 = arith.constant 0 : i32
    return %arg0, %c0_i32 : i32, i32
  }
}

</mosaic_0001>

<llo_original>
// kernel: tpu_custom_call.1
$region0: #{tpu_custom_call.1}
  #allocation0 [shape = 'u32[]', space=smem, size = 0x4, offset = 0x4, fixed_abs, tag = 'smem constant byte address 0x4 - core index']
  #allocation1 [shape = 'u32[144,128]{1,0:T(1,128)}', space=vmem, size = 0x12000, scoped, tag = 'internal scratch']
  %s0 = inlined_call_operand.vmem [shape: f32[200,10], index: 0, kind: input, shape index: {}]
  %s1 = inlined_call_operand.vmem [shape: f32[10,32], index: 1, kind: input, shape index: {}]
  %s2 = inlined_call_operand.vmem [shape: f32[1,32], index: 2, kind: input, shape index: {}]
  %s3 = inlined_call_operand.vmem [shape: f32[32,32], index: 3, kind: input, shape index: {}]
  %s4 = inlined_call_operand.vmem [shape: f32[1,32], index: 4, kind: input, shape index: {}]
  %s5 = inlined_call_operand.vmem [shape: f32[32,128], index: 5, kind: input, shape index: {}]
  %s6 = inlined_call_operand.vmem [shape: f32[1,128], index: 6, kind: input, shape index: {}]
  %s7 = inlined_call_operand.hbm [shape: f32[200,128], index: 7, kind: output, shape index: {}]
  %s8 = sld [smem:[#allocation0]]
  $region38: #{tpu_custom_call.1} parent=0
    _
  %s10 = ssub.s32 1, %s8
  %s11 = scalar_select 0, %s10, %s8
  $region1: #{tpu_custom_call.1} parent=0
    #allocation2 [shape = 'u8[102400]{0}', space=vmem, size = 0x19000, scoped, tag = 'output window, operand 0, single buffered']
    #allocation3 [shape = 's32[1]{0}', space=sflag, size = 0x4, scoped, tag = 'scoped memory for tpu_custom_call.1']
    %12 = vsyncpa [#allocation3], 0
    // Predicated region
    $region2: #{tpu_custom_call.1} parent=1 // pred_check
      _
    $region3: #{tpu_custom_call.1} parent=1 // pred_check_branch
      %14 = sbr.rel (0) target = $region5
    $region4: #{tpu_custom_call.1} parent=1 // pred_region
      _
    $region5: #{tpu_custom_call.1} parent=1 // pred_fallthru
      _
    // Predicated region
    $region6: #{tpu_custom_call.1} parent=1 // pred_check
      _
    $region7: #{tpu_custom_call.1} parent=1 // pred_check_branch
      %16 = sbr.rel (0) target = $region9
    $region8: #{tpu_custom_call.1} parent=1 // pred_region
      _
    $region9: #{tpu_custom_call.1} parent=1 // pred_fallthru
      _
    // Predicated region
    $region10: #{tpu_custom_call.1} parent=1 // pred_check
      _
    $region11: #{tpu_custom_call.1} parent=1 // pred_check_branch
      %18 = sbr.rel (0) target = $region13
    $region12: #{tpu_custom_call.1} parent=1 // pred_region
      _
    $region13: #{tpu_custom_call.1} parent=1 // pred_fallthru
      _
    // Predicated region
    $region14: #{tpu_custom_call.1} parent=1 // pred_check
      _
    $region15: #{tpu_custom_call.1} parent=1 // pred_check_branch
      %20 = sbr.rel (0) target = $region17
    $region16: #{tpu_custom_call.1} parent=1 // pred_region
      _
    $region17: #{tpu_custom_call.1} parent=1 // pred_fallthru
      _
    // Predicated region
    $region18: #{tpu_custom_call.1} parent=1 // pred_check
      _
    $region19: #{tpu_custom_call.1} parent=1 // pred_check_branch
      %22 = sbr.rel (0) target = $region21
    $region20: #{tpu_custom_call.1} parent=1 // pred_region
      _
    $region21: #{tpu_custom_call.1} parent=1 // pred_fallthru
      _
    // Predicated region
    $region22: #{tpu_custom_call.1} parent=1 // pred_check
      _
    $region23: #{tpu_custom_call.1} parent=1 // pred_check_branch
      %24 = sbr.rel (0) target = $region25
    $region24: #{tpu_custom_call.1} parent=1 // pred_region
      _
    $region25: #{tpu_custom_call.1} parent=1 // pred_fallthru
      _
    // Predicated region
    $region26: #{tpu_custom_call.1} parent=1 // pred_check
      _
    $region27: #{tpu_custom_call.1} parent=1 // pred_check_branch
      %26 = sbr.rel (0) target = $region29
    $region28: #{tpu_custom_call.1} parent=1 // pred_region
      _
    $region29: #{tpu_custom_call.1} parent=1 // pred_fallthru
      _
    %v27 = vld [vmem:[%s0] sm:$0xff]
    %v28 = vld [vmem:[%s0 + $0x8] sm:$0xff]
    %v29 = vld [vmem:[%s0 + $0x10] sm:$0xff]
    %v30 = vld [vmem:[%s0 + $0x18] sm:$0xff]
    %v31 = vld [vmem:[%s0 + $0x20] sm:$0xff]
    %v32 = vld [vmem:[%s0 + $0x28] sm:$0xff]
    %v33 = vld [vmem:[%s0 + $0x30] sm:$0xff]
    %v34 = vld [vmem:[%s0 + $0x38] sm:$0xff]
    %v35 = vld [vmem:[%s0 + $0x40] sm:$0xff]
    %v36 = vld [vmem:[%s0 + $0x48] sm:$0xff]
    %v37 = vld [vmem:[%s0 + $0x50] sm:$0xff]
    %v38 = vld [vmem:[%s0 + $0x58] sm:$0xff]
    %v39 = vld [vmem:[%s0 + $0x60] sm:$0xff]
    %v40 = vld [vmem:[%s0 + $0x68] sm:$0xff]
    %v41 = vld [vmem:[%s0 + $0x70] sm:$0xff]
    %v42 = vld [vmem:[%s0 + $0x78] sm:$0xff]
    %v43 = vld [vmem:[%s0 + $0x80] sm:$0xff]
    %v44 = vld [vmem:[%s0 + $0x88] sm:$0xff]
    %v45 = vld [vmem:[%s0 + $0x90] sm:$0xff]
    %v46 = vld [vmem:[%s0 + $0x98] sm:$0xff]
    %v47 = vld [vmem:[%s0 + $0xa0] sm:$0xff]
    %v48 = vld [vmem:[%s0 + $0xa8] sm:$0xff]
    %v49 = vld [vmem:[%s0 + $0xb0] sm:$0xff]
    %v50 = vld [vmem:[%s0 + $0xb8] sm:$0xff]
    %v51 = vld [vmem:[%s0 + $0xc0] sm:$0xff]
    %v52 = vld [vmem:[%s1] sm:$0xff]
    %v53 = vld [vmem:[%s1 + $0x8] sm:$0x3]
    %v54 = vld [vmem:[%s2] sm:$0x1]
    %v56 = vlaneseq
    %v57 = vshrl.u32 %v56, 7
    %v58 = vsub.s32 0, %v57
    %v59 = vrot.slane %v54, %v58
    %vm61 = vcmask 80896
    %v63 = vsel %vm61, %v27, 0
    %v66 = vsel %vm61, %v28, 0
    %v69 = vsel %vm61, %v29, 0
    %v72 = vsel %vm61, %v30, 0
    %v75 = vsel %vm61, %v31, 0
    %v78 = vsel %vm61, %v32, 0
    %v81 = vsel %vm61, %v33, 0
    %v84 = vsel %vm61, %v34, 0
    %v87 = vsel %vm61, %v35, 0
    %v90 = vsel %vm61, %v36, 0
    %v93 = vsel %vm61, %v37, 0
    %v96 = vsel %vm61, %v38, 0
    %v99 = vsel %vm61, %v39, 0
    %v102 = vsel %vm61, %v40, 0
    %v105 = vsel %vm61, %v41, 0
    %v108 = vsel %vm61, %v42, 0
    %v111 = vsel %vm61, %v43, 0
    %v114 = vsel %vm61, %v44, 0
    %v117 = vsel %vm61, %v45, 0
    %v120 = vsel %vm61, %v46, 0
    %v123 = vsel %vm61, %v47, 0
    %v126 = vsel %vm61, %v48, 0
    %v129 = vsel %vm61, %v49, 0
    %v132 = vsel %vm61, %v50, 0
    %v135 = vsel %vm61, %v51, 0
    %vm137 = vcmask 1041408
    %v139 = vsel %vm137, %v53, 0
    %141 = vmatprep.subr.mxu0 0.0
    %142 = vmatpush1.msra.mxu0 0.0
    %143 = vmatprep.subr.mxu0 0.0
    %144 = vmatpush1.msra.mxu0 0.0
    %145 = vmatprep.subr.mxu0 0.0
    %146 = vmatpush1.msra.mxu0 0.0
    %147 = vmatprep.subr.mxu0 0.0
    %148 = vmatpush1.msra.mxu0 0.0
    %149 = vmatprep.subr.mxu0 0.0
    %150 = vmatpush1.msra.mxu0 0.0
    %151 = vmatprep.subr.mxu0 0.0
    %152 = vmatpush1.msra.mxu0 0.0
    %153 = vmatprep.subr.mxu0 0.0
    %154 = vmatpush1.msra.mxu0 0.0
    %155 = vmatprep.subr.mxu0 0.0
    %156 = vmatpush1.msra.mxu0 0.0
    %157 = vmatprep.subr.mxu0 0.0
    %158 = vmatpush1.msra.mxu0 0.0
    %159 = vmatprep.subr.mxu0 0.0
    %160 = vmatpush1.msra.mxu0 0.0
    %161 = vmatprep.subr.mxu0 0.0
    %162 = vmatpush1.msra.mxu0 0.0
    %163 = vmatprep.subr.mxu0 0.0
    %164 = vmatpush1.msra.mxu0 0.0
    %165 = vmatprep.subr.mxu0 0.0
    %166 = vmatpush1.msra.mxu0 0.0
    %167 = vmatprep.subr.mxu0 0.0
    %168 = vmatpush1.msra.mxu0 0.0
    %169 = vmatprep.subr.mxu0 0.0
    %170 = vmatpush1.msra.mxu0 %v139
    %171 = vmatprep.subr.mxu0 0.0
    %172 = vmatpush1.msra.mxu0 %v52
    %173 = vmatprep.subr.mxu0 0.0
    %174 = vmatpush2.msra.mxu0 0.0
    %175 = vmatprep.subr.mxu0 0.0
    %176 = vmatpush2.msra.mxu0 0.0
    %177 = vmatprep.subr.mxu0 0.0
    %178 = vmatpush2.msra.mxu0 0.0
    %179 = vmatprep.subr.mxu0 0.0
    %180 = vmatpush2.msra.mxu0 0.0
    %181 = vmatprep.subr.mxu0 0.0
    %182 = vmatpush2.msra.mxu0 0.0
    %183 = vmatprep.subr.mxu0 0.0
    %184 = vmatpush2.msra.mxu0 0.0
    %185 = vmatprep.subr.mxu0 0.0
    %186 = vmatpush2.msra.mxu0 0.0
    %187 = vmatprep.subr.mxu0 0.0
    %188 = vmatpush2.msra.mxu0 0.0
    %189 = vmatprep.subr.mxu0 0.0
    %190 = vmatpush2.msra.mxu0 0.0
    %191 = vmatprep.subr.mxu0 0.0
    %192 = vmatpush2.msra.mxu0 0.0
    %193 = vmatprep.subr.mxu0 0.0
    %194 = vmatpush2.msra.mxu0 0.0
    %195 = vmatprep.subr.mxu0 0.0
    %196 = vmatpush2.msra.mxu0 0.0
    %197 = vmatprep.subr.mxu0 0.0
    %198 = vmatpush2.msra.mxu0 0.0
    %199 = vmatprep.subr.mxu0 0.0
    %200 = vmatpush2.msra.mxu0 0.0
    %201 = vmatprep.subr.mxu0 0.0
    %202 = vmatpush2.msra.mxu0 0.0
    %203 = vmatprep.subr.mxu0 0.0
    %204 = vmatpush2.msra.mxu0 0.0
    %205 = vmatprep.mubr.f32.mxu0 0.0
    %206 = vmatmul.mubr.f32.gmra.mxu0 %v63
    %v207 = vpop.f32.mrf.mxu0
    %v208 = vadd.f32 %v59, %v207
    %v209 = vpop.f32.mrf.mxu0
    %210 = vmatprep.mubr.f32.mxu0 0.0
    %211 = vmatmul.mubr.f32.gmra.mxu0 %v66
    %v212 = vpop.f32.mrf.mxu0
    %v213 = vadd.f32 %v59, %v212
    %v214 = vpop.f32.mrf.mxu0
    %215 = vmatprep.mubr.f32.mxu0 0.0
    %216 = vmatmul.mubr.f32.gmra.mxu0 %v69
    %v217 = vpop.f32.mrf.mxu0
    %v218 = vadd.f32 %v59, %v217
    %v219 = vpop.f32.mrf.mxu0
    %220 = vmatprep.mubr.f32.mxu0 0.0
    %221 = vmatmul.mubr.f32.gmra.mxu0 %v72
    %v222 = vpop.f32.mrf.mxu0
    %v223 = vadd.f32 %v59, %v222
    %v224 = vpop.f32.mrf.mxu0
    %225 = vmatprep.mubr.f32.mxu0 0.0
    %226 = vmatmul.mubr.f32.gmra.mxu0 %v75
    %v227 = vpop.f32.mrf.mxu0
    %v228 = vadd.f32 %v59, %v227
    %v229 = vpop.f32.mrf.mxu0
    %230 = vmatprep.mubr.f32.mxu0 0.0
    %231 = vmatmul.mubr.f32.gmra.mxu0 %v78
    %v232 = vpop.f32.mrf.mxu0
    %v233 = vadd.f32 %v59, %v232
    %v234 = vpop.f32.mrf.mxu0
    %235 = vmatprep.mubr.f32.mxu0 0.0
    %236 = vmatmul.mubr.f32.gmra.mxu0 %v81
    %v237 = vpop.f32.mrf.mxu0
    %v238 = vadd.f32 %v59, %v237
    %v239 = vpop.f32.mrf.mxu0
    %240 = vmatprep.mubr.f32.mxu0 0.0
    %241 = vmatmul.mubr.f32.gmra.mxu0 %v84
    %v242 = vpop.f32.mrf.mxu0
    %v243 = vadd.f32 %v59, %v242
    %v244 = vpop.f32.mrf.mxu0
    %245 = vmatprep.mubr.f32.mxu0 0.0
    %246 = vmatmul.mubr.f32.gmra.mxu0 %v87
    %v247 = vpop.f32.mrf.mxu0
    %v248 = vadd.f32 %v59, %v247
    %v249 = vpop.f32.mrf.mxu0
    %250 = vmatprep.mubr.f32.mxu0 0.0
    %251 = vmatmul.mubr.f32.gmra.mxu0 %v90
    %v252 = vpop.f32.mrf.mxu0
    %v253 = vadd.f32 %v59, %v252
    %v254 = vpop.f32.mrf.mxu0
    %255 = vmatprep.mubr.f32.mxu0 0.0
    %256 = vmatmul.mubr.f32.gmra.mxu0 %v93
    %v257 = vpop.f32.mrf.mxu0
    %v258 = vadd.f32 %v59, %v257
    %v259 = vpop.f32.mrf.mxu0
    %260 = vmatprep.mubr.f32.mxu0 0.0
    %261 = vmatmul.mubr.f32.gmra.mxu0 %v96
    %v262 = vpop.f32.mrf.mxu0
    %v263 = vadd.f32 %v59, %v262
    %v264 = vpop.f32.mrf.mxu0
    %265 = vmatprep.mubr.f32.mxu0 0.0
    %266 = vmatmul.mubr.f32.gmra.mxu0 %v99
    %v267 = vpop.f32.mrf.mxu0
    %v268 = vadd.f32 %v59, %v267
    %v269 = vpop.f32.mrf.mxu0
    %270 = vmatprep.mubr.f32.mxu0 0.0
    %271 = vmatmul.mubr.f32.gmra.mxu0 %v102
    %v272 = vpop.f32.mrf.mxu0
    %v273 = vadd.f32 %v59, %v272
    %v274 = vpop.f32.mrf.mxu0
    %275 = vmatprep.mubr.f32.mxu0 0.0
    %276 = vmatmul.mubr.f32.gmra.mxu0 %v105
    %v277 = vpop.f32.mrf.mxu0
    %v278 = vadd.f32 %v59, %v277
    %v279 = vpop.f32.mrf.mxu0
    %280 = vmatprep.mubr.f32.mxu0 0.0
    %281 = vmatmul.mubr.f32.gmra.mxu0 %v108
    %v282 = vpop.f32.mrf.mxu0
    %v283 = vadd.f32 %v59, %v282
    %v284 = vpop.f32.mrf.mxu0
    %285 = vmatprep.mubr.f32.mxu0 0.0
    %286 = vmatmul.mubr.f32.gmra.mxu0 %v111
    %v287 = vpop.f32.mrf.mxu0
    %v288 = vadd.f32 %v59, %v287
    %v289 = vpop.f32.mrf.mxu0
    %290 = vmatprep.mubr.f32.mxu0 0.0
    %291 = vmatmul.mubr.f32.gmra.mxu0 %v114
    %v292 = vpop.f32.mrf.mxu0
    %v293 = vadd.f32 %v59, %v292
    %v294 = vpop.f32.mrf.mxu0
    %295 = vmatprep.mubr.f32.mxu0 0.0
    %296 = vmatmul.mubr.f32.gmra.mxu0 %v117
    %v297 = vpop.f32.mrf.mxu0
    %v298 = vadd.f32 %v59, %v297
    %v299 = vpop.f32.mrf.mxu0
    %300 = vmatprep.mubr.f32.mxu0 0.0
    %301 = vmatmul.mubr.f32.gmra.mxu0 %v120
    %v302 = vpop.f32.mrf.mxu0
    %v303 = vadd.f32 %v59, %v302
    %v304 = vpop.f32.mrf.mxu0
    %305 = vmatprep.mubr.f32.mxu0 0.0
    %306 = vmatmul.mubr.f32.gmra.mxu0 %v123
    %v307 = vpop.f32.mrf.mxu0
    %v308 = vadd.f32 %v59, %v307
    %v309 = vpop.f32.mrf.mxu0
    %310 = vmatprep.mubr.f32.mxu0 0.0
    %311 = vmatmul.mubr.f32.gmra.mxu0 %v126
    %v312 = vpop.f32.mrf.mxu0
    %v313 = vadd.f32 %v59, %v312
    %v314 = vpop.f32.mrf.mxu0
    %315 = vmatprep.mubr.f32.mxu0 0.0
    %316 = vmatmul.mubr.f32.gmra.mxu0 %v129
    %v317 = vpop.f32.mrf.mxu0
    %v318 = vadd.f32 %v59, %v317
    %v319 = vpop.f32.mrf.mxu0
    %320 = vmatprep.mubr.f32.mxu0 0.0
    %321 = vmatmul.mubr.f32.gmra.mxu0 %v132
    %v322 = vpop.f32.mrf.mxu0
    %v323 = vadd.f32 %v59, %v322
    %v324 = vpop.f32.mrf.mxu0
    %325 = vmatprep.mubr.f32.mxu0 0.0
    %326 = vmatmul.mubr.f32.gmra.mxu0 %v135
    %v327 = vpop.f32.mrf.mxu0
    %v328 = vadd.f32 %v59, %v327
    %v329 = vpop.f32.mrf.mxu0
    %330 = vdwg.mxu0
    %v331 = vmax.f32 %v208, 0.0
    %v332 = vmax.f32 %v213, 0.0
    %v333 = vmax.f32 %v218, 0.0
    %v334 = vmax.f32 %v223, 0.0
    %v335 = vmax.f32 %v228, 0.0
    %v336 = vmax.f32 %v233, 0.0
    %v337 = vmax.f32 %v238, 0.0
    %v338 = vmax.f32 %v243, 0.0
    %v339 = vmax.f32 %v248, 0.0
    %v340 = vmax.f32 %v253, 0.0
    %v341 = vmax.f32 %v258, 0.0
    %v342 = vmax.f32 %v263, 0.0
    %v343 = vmax.f32 %v268, 0.0
    %v344 = vmax.f32 %v273, 0.0
    %v345 = vmax.f32 %v278, 0.0
    %v346 = vmax.f32 %v283, 0.0
    %v347 = vmax.f32 %v288, 0.0
    %v348 = vmax.f32 %v293, 0.0
    %v349 = vmax.f32 %v298, 0.0
    %v350 = vmax.f32 %v303, 0.0
    %v351 = vmax.f32 %v308, 0.0
    %v352 = vmax.f32 %v313, 0.0
    %v353 = vmax.f32 %v318, 0.0
    %v354 = vmax.f32 %v323, 0.0
    %v355 = vmax.f32 %v328, 0.0
    %v356 = vld [vmem:[%s3] sm:$0xff]
    %v357 = vld [vmem:[%s3 + $0x8] sm:$0xff]
    %v358 = vld [vmem:[%s3 + $0x10] sm:$0xff]
    %v359 = vld [vmem:[%s3 + $0x18] sm:$0xff]
    %v360 = vld [vmem:[%s4] sm:$0x1]
    %v362 = vlaneseq
    %v363 = vshrl.u32 %v362, 7
    %v364 = vsub.s32 0, %v363
    %v365 = vrot.slane %v360, %v364
    %vm367 = vcmask 261120
    %v369 = vsel %vm367, %v331, 0
    %v372 = vsel %vm367, %v332, 0
    %v375 = vsel %vm367, %v333, 0
    %v378 = vsel %vm367, %v334, 0
    %v381 = vsel %vm367, %v335, 0
    %v384 = vsel %vm367, %v336, 0
    %v387 = vsel %vm367, %v337, 0
    %v390 = vsel %vm367, %v338, 0
    %v393 = vsel %vm367, %v339, 0
    %v396 = vsel %vm367, %v340, 0
    %v399 = vsel %vm367, %v341, 0
    %v402 = vsel %vm367, %v342, 0
    %v405 = vsel %vm367, %v343, 0
    %v408 = vsel %vm367, %v344, 0
    %v411 = vsel %vm367, %v345, 0
    %v414 = vsel %vm367, %v346, 0
    %v417 = vsel %vm367, %v347, 0
    %v420 = vsel %vm367, %v348, 0
    %v423 = vsel %vm367, %v349, 0
    %v426 = vsel %vm367, %v350, 0
    %v429 = vsel %vm367, %v351, 0
    %v432 = vsel %vm367, %v352, 0
    %v435 = vsel %vm367, %v353, 0
    %v438 = vsel %vm367, %v354, 0
    %v441 = vsel %vm367, %v355, 0
    %443 = vmatprep.subr.mxu0 0.0
    %444 = vmatpush1.msra.mxu0 0.0
    %445 = vmatprep.subr.mxu0 0.0
    %446 = vmatpush1.msra.mxu0 0.0
    %447 = vmatprep.subr.mxu0 0.0
    %448 = vmatpush1.msra.mxu0 0.0
    %449 = vmatprep.subr.mxu0 0.0
    %450 = vmatpush1.msra.mxu0 0.0
    %451 = vmatprep.subr.mxu0 0.0
    %452 = vmatpush1.msra.mxu0 0.0
    %453 = vmatprep.subr.mxu0 0.0
    %454 = vmatpush1.msra.mxu0 0.0
    %455 = vmatprep.subr.mxu0 0.0
    %456 = vmatpush1.msra.mxu0 0.0
    %457 = vmatprep.subr.mxu0 0.0
    %458 = vmatpush1.msra.mxu0 0.0
    %459 = vmatprep.subr.mxu0 0.0
    %460 = vmatpush1.msra.mxu0 0.0
    %461 = vmatprep.subr.mxu0 0.0
    %462 = vmatpush1.msra.mxu0 0.0
    %463 = vmatprep.subr.mxu0 0.0
    %464 = vmatpush1.msra.mxu0 0.0
    %465 = vmatprep.subr.mxu0 0.0
    %466 = vmatpush1.msra.mxu0 0.0
    %467 = vmatprep.subr.mxu0 0.0
    %468 = vmatpush1.msra.mxu0 %v359
    %469 = vmatprep.subr.mxu0 0.0
    %470 = vmatpush1.msra.mxu0 %v358
    %471 = vmatprep.subr.mxu0 0.0
    %472 = vmatpush1.msra.mxu0 %v357
    %473 = vmatprep.subr.mxu0 0.0
    %474 = vmatpush1.msra.mxu0 %v356
    %475 = vmatprep.subr.mxu0 0.0
    %476 = vmatpush2.msra.mxu0 0.0
    %477 = vmatprep.subr.mxu0 0.0
    %478 = vmatpush2.msra.mxu0 0.0
    %479 = vmatprep.subr.mxu0 0.0
    %480 = vmatpush2.msra.mxu0 0.0
    %481 = vmatprep.subr.mxu0 0.0
    %482 = vmatpush2.msra.mxu0 0.0
    %483 = vmatprep.subr.mxu0 0.0
    %484 = vmatpush2.msra.mxu0 0.0
    %485 = vmatprep.subr.mxu0 0.0
    %486 = vmatpush2.msra.mxu0 0.0
    %487 = vmatprep.subr.mxu0 0.0
    %488 = vmatpush2.msra.mxu0 0.0
    %489 = vmatprep.subr.mxu0 0.0
    %490 = vmatpush2.msra.mxu0 0.0
    %491 = vmatprep.subr.mxu0 0.0
    %492 = vmatpush2.msra.mxu0 0.0
    %493 = vmatprep.subr.mxu0 0.0
    %494 = vmatpush2.msra.mxu0 0.0
    %495 = vmatprep.subr.mxu0 0.0
    %496 = vmatpush2.msra.mxu0 0.0
    %497 = vmatprep.subr.mxu0 0.0
    %498 = vmatpush2.msra.mxu0 0.0
    %499 = vmatprep.subr.mxu0 0.0
    %500 = vmatpush2.msra.mxu0 0.0
    %501 = vmatprep.subr.mxu0 0.0
    %502 = vmatpush2.msra.mxu0 0.0
    %503 = vmatprep.subr.mxu0 0.0
    %504 = vmatpush2.msra.mxu0 0.0
    %505 = vmatprep.subr.mxu0 0.0
    %506 = vmatpush2.msra.mxu0 0.0
    %507 = vmatprep.mubr.f32.mxu0 0.0
    %508 = vmatmul.mubr.f32.gmra.mxu0 %v369
    %v509 = vpop.f32.mrf.mxu0
    %v510 = vadd.f32 %v365, %v509
    %v511 = vpop.f32.mrf.mxu0
    %512 = vmatprep.mubr.f32.mxu0 0.0
    %513 = vmatmul.mubr.f32.gmra.mxu0 %v372
    %v514 = vpop.f32.mrf.mxu0
    %v515 = vadd.f32 %v365, %v514
    %v516 = vpop.f32.mrf.mxu0
    %517 = vmatprep.mubr.f32.mxu0 0.0
    %518 = vmatmul.mubr.f32.gmra.mxu0 %v375
    %v519 = vpop.f32.mrf.mxu0
    %v520 = vadd.f32 %v365, %v519
    %v521 = vpop.f32.mrf.mxu0
    %522 = vmatprep.mubr.f32.mxu0 0.0
    %523 = vmatmul.mubr.f32.gmra.mxu0 %v378
    %v524 = vpop.f32.mrf.mxu0
    %v525 = vadd.f32 %v365, %v524
    %v526 = vpop.f32.mrf.mxu0
    %527 = vmatprep.mubr.f32.mxu0 0.0
    %528 = vmatmul.mubr.f32.gmra.mxu0 %v381
    %v529 = vpop.f32.mrf.mxu0
    %v530 = vadd.f32 %v365, %v529
    %v531 = vpop.f32.mrf.mxu0
    %532 = vmatprep.mubr.f32.mxu0 0.0
    %533 = vmatmul.mubr.f32.gmra.mxu0 %v384
    %v534 = vpop.f32.mrf.mxu0
    %v535 = vadd.f32 %v365, %v534
    %v536 = vpop.f32.mrf.mxu0
    %537 = vmatprep.mubr.f32.mxu0 0.0
    %538 = vmatmul.mubr.f32.gmra.mxu0 %v387
    %v539 = vpop.f32.mrf.mxu0
    %v540 = vadd.f32 %v365, %v539
    %v541 = vpop.f32.mrf.mxu0
    %542 = vmatprep.mubr.f32.mxu0 0.0
    %543 = vmatmul.mubr.f32.gmra.mxu0 %v390
    %v544 = vpop.f32.mrf.mxu0
    %v545 = vadd.f32 %v365, %v544
    %v546 = vpop.f32.mrf.mxu0
    %547 = vmatprep.mubr.f32.mxu0 0.0
    %548 = vmatmul.mubr.f32.gmra.mxu0 %v393
    %v549 = vpop.f32.mrf.mxu0
    %v550 = vadd.f32 %v365, %v549
    %v551 = vpop.f32.mrf.mxu0
    %552 = vmatprep.mubr.f32.mxu0 0.0
    %553 = vmatmul.mubr.f32.gmra.mxu0 %v396
    %v554 = vpop.f32.mrf.mxu0
    %v555 = vadd.f32 %v365, %v554
    %v556 = vpop.f32.mrf.mxu0
    %557 = vmatprep.mubr.f32.mxu0 0.0
    %558 = vmatmul.mubr.f32.gmra.mxu0 %v399
    %v559 = vpop.f32.mrf.mxu0
    %v560 = vadd.f32 %v365, %v559
    %v561 = vpop.f32.mrf.mxu0
    %562 = vmatprep.mubr.f32.mxu0 0.0
    %563 = vmatmul.mubr.f32.gmra.mxu0 %v402
    %v564 = vpop.f32.mrf.mxu0
    %v565 = vadd.f32 %v365, %v564
    %v566 = vpop.f32.mrf.mxu0
    %567 = vmatprep.mubr.f32.mxu0 0.0
    %568 = vmatmul.mubr.f32.gmra.mxu0 %v405
    %v569 = vpop.f32.mrf.mxu0
    %v570 = vadd.f32 %v365, %v569
    %v571 = vpop.f32.mrf.mxu0
    %572 = vmatprep.mubr.f32.mxu0 0.0
    %573 = vmatmul.mubr.f32.gmra.mxu0 %v408
    %v574 = vpop.f32.mrf.mxu0
    %v575 = vadd.f32 %v365, %v574
    %v576 = vpop.f32.mrf.mxu0
    %577 = vmatprep.mubr.f32.mxu0 0.0
    %578 = vmatmul.mubr.f32.gmra.mxu0 %v411
    %v579 = vpop.f32.mrf.mxu0
    %v580 = vadd.f32 %v365, %v579
    %v581 = vpop.f32.mrf.mxu0
    %582 = vmatprep.mubr.f32.mxu0 0.0
    %583 = vmatmul.mubr.f32.gmra.mxu0 %v414
    %v584 = vpop.f32.mrf.mxu0
    %v585 = vadd.f32 %v365, %v584
    %v586 = vpop.f32.mrf.mxu0
    %587 = vmatprep.mubr.f32.mxu0 0.0
    %588 = vmatmul.mubr.f32.gmra.mxu0 %v417
    %v589 = vpop.f32.mrf.mxu0
    %v590 = vadd.f32 %v365, %v589
    %v591 = vpop.f32.mrf.mxu0
    %592 = vmatprep.mubr.f32.mxu0 0.0
    %593 = vmatmul.mubr.f32.gmra.mxu0 %v420
    %v594 = vpop.f32.mrf.mxu0
    %v595 = vadd.f32 %v365, %v594
    %v596 = vpop.f32.mrf.mxu0
    %597 = vmatprep.mubr.f32.mxu0 0.0
    %598 = vmatmul.mubr.f32.gmra.mxu0 %v423
    %v599 = vpop.f32.mrf.mxu0
    %v600 = vadd.f32 %v365, %v599
    %v601 = vpop.f32.mrf.mxu0
    %602 = vmatprep.mubr.f32.mxu0 0.0
    %603 = vmatmul.mubr.f32.gmra.mxu0 %v426
    %v604 = vpop.f32.mrf.mxu0
    %v605 = vadd.f32 %v365, %v604
    %v606 = vpop.f32.mrf.mxu0
    %607 = vmatprep.mubr.f32.mxu0 0.0
    %608 = vmatmul.mubr.f32.gmra.mxu0 %v429
    %v609 = vpop.f32.mrf.mxu0
    %v610 = vadd.f32 %v365, %v609
    %v611 = vpop.f32.mrf.mxu0
    %612 = vmatprep.mubr.f32.mxu0 0.0
    %613 = vmatmul.mubr.f32.gmra.mxu0 %v432
    %v614 = vpop.f32.mrf.mxu0
    %v615 = vadd.f32 %v365, %v614
    %v616 = vpop.f32.mrf.mxu0
    %617 = vmatprep.mubr.f32.mxu0 0.0
    %618 = vmatmul.mubr.f32.gmra.mxu0 %v435
    %v619 = vpop.f32.mrf.mxu0
    %v620 = vadd.f32 %v365, %v619
    %v621 = vpop.f32.mrf.mxu0
    %622 = vmatprep.mubr.f32.mxu0 0.0
    %623 = vmatmul.mubr.f32.gmra.mxu0 %v438
    %v624 = vpop.f32.mrf.mxu0
    %v625 = vadd.f32 %v365, %v624
    %v626 = vpop.f32.mrf.mxu0
    %627 = vmatprep.mubr.f32.mxu0 0.0
    %628 = vmatmul.mubr.f32.gmra.mxu0 %v441
    %v629 = vpop.f32.mrf.mxu0
    %v630 = vadd.f32 %v365, %v629
    %v631 = vpop.f32.mrf.mxu0
    %632 = vdwg.mxu0
    %v633 = vmax.f32 %v510, 0.0
    %v634 = vmax.f32 %v515, 0.0
    %v635 = vmax.f32 %v520, 0.0
    %v636 = vmax.f32 %v525, 0.0
    %v637 = vmax.f32 %v530, 0.0
    %v638 = vmax.f32 %v535, 0.0
    %v639 = vmax.f32 %v540, 0.0
    %v640 = vmax.f32 %v545, 0.0
    %v641 = vmax.f32 %v550, 0.0
    %v642 = vmax.f32 %v555, 0.0
    %v643 = vmax.f32 %v560, 0.0
    %v644 = vmax.f32 %v565, 0.0
    %v645 = vmax.f32 %v570, 0.0
    %v646 = vmax.f32 %v575, 0.0
    %v647 = vmax.f32 %v580, 0.0
    %v648 = vmax.f32 %v585, 0.0
    %v649 = vmax.f32 %v590, 0.0
    %v650 = vmax.f32 %v595, 0.0
    %v651 = vmax.f32 %v600, 0.0
    %v652 = vmax.f32 %v605, 0.0
    %v653 = vmax.f32 %v610, 0.0
    %v654 = vmax.f32 %v615, 0.0
    %v655 = vmax.f32 %v620, 0.0
    %v656 = vmax.f32 %v625, 0.0
    %v657 = vmax.f32 %v630, 0.0
    %v658 = vld [vmem:[%s5] sm:$0xff]
    %v659 = vld [vmem:[%s5 + $0x8] sm:$0xff]
    %v660 = vld [vmem:[%s5 + $0x10] sm:$0xff]
    %v661 = vld [vmem:[%s5 + $0x18] sm:$0xff]
    %v662 = vld [vmem:[%s6] sm:$0x1]
    %v664 = vlaneseq
    %v665 = vshrl.u32 %v664, 7
    %v666 = vsub.s32 0, %v665
    %v667 = vrot.slane %v662, %v666
    %v670 = vsel %vm367, %v633, 0
    %v673 = vsel %vm367, %v634, 0
    %v676 = vsel %vm367, %v635, 0
    %v679 = vsel %vm367, %v636, 0
    %v682 = vsel %vm367, %v637, 0
    %v685 = vsel %vm367, %v638, 0
    %v688 = vsel %vm367, %v639, 0
    %v691 = vsel %vm367, %v640, 0
    %v694 = vsel %vm367, %v641, 0
    %v697 = vsel %vm367, %v642, 0
    %v700 = vsel %vm367, %v643, 0
    %v703 = vsel %vm367, %v644, 0
    %v706 = vsel %vm367, %v645, 0
    %v709 = vsel %vm367, %v646, 0
    %v712 = vsel %vm367, %v647, 0
    %v715 = vsel %vm367, %v648, 0
    %v718 = vsel %vm367, %v649, 0
    %v721 = vsel %vm367, %v650, 0
    %v724 = vsel %vm367, %v651, 0
    %v727 = vsel %vm367, %v652, 0
    %v730 = vsel %vm367, %v653, 0
    %v733 = vsel %vm367, %v654, 0
    %v736 = vsel %vm367, %v655, 0
    %v739 = vsel %vm367, %v656, 0
    %v742 = vsel %vm367, %v657, 0
    %744 = vmatprep.subr.mxu0 0.0
    %745 = vmatpush1.msra.mxu0 0.0
    %746 = vmatprep.subr.mxu0 0.0
    %747 = vmatpush1.msra.mxu0 0.0
    %748 = vmatprep.subr.mxu0 0.0
    %749 = vmatpush1.msra.mxu0 0.0
    %750 = vmatprep.subr.mxu0 0.0
    %751 = vmatpush1.msra.mxu0 0.0
    %752 = vmatprep.subr.mxu0 0.0
    %753 = vmatpush1.msra.mxu0 0.0
    %754 = vmatprep.subr.mxu0 0.0
    %755 = vmatpush1.msra.mxu0 0.0
    %756 = vmatprep.subr.mxu0 0.0
    %757 = vmatpush1.msra.mxu0 0.0
    %758 = vmatprep.subr.mxu0 0.0
    %759 = vmatpush1.msra.mxu0 0.0
    %760 = vmatprep.subr.mxu0 0.0
    %761 = vmatpush1.msra.mxu0 0.0
    %762 = vmatprep.subr.mxu0 0.0
    %763 = vmatpush1.msra.mxu0 0.0
    %764 = vmatprep.subr.mxu0 0.0
    %765 = vmatpush1.msra.mxu0 0.0
    %766 = vmatprep.subr.mxu0 0.0
    %767 = vmatpush1.msra.mxu0 0.0
    %768 = vmatprep.subr.mxu0 0.0
    %769 = vmatpush1.msra.mxu0 %v661
    %770 = vmatprep.subr.mxu0 0.0
    %771 = vmatpush1.msra.mxu0 %v660
    %772 = vmatprep.subr.mxu0 0.0
    %773 = vmatpush1.msra.mxu0 %v659
    %774 = vmatprep.subr.mxu0 0.0
    %775 = vmatpush1.msra.mxu0 %v658
    %776 = vmatprep.subr.mxu0 0.0
    %777 = vmatpush2.msra.mxu0 0.0
    %778 = vmatprep.subr.mxu0 0.0
    %779 = vmatpush2.msra.mxu0 0.0
    %780 = vmatprep.subr.mxu0 0.0
    %781 = vmatpush2.msra.mxu0 0.0
    %782 = vmatprep.subr.mxu0 0.0
    %783 = vmatpush2.msra.mxu0 0.0
    %784 = vmatprep.subr.mxu0 0.0
    %785 = vmatpush2.msra.mxu0 0.0
    %786 = vmatprep.subr.mxu0 0.0
    %787 = vmatpush2.msra.mxu0 0.0
    %788 = vmatprep.subr.mxu0 0.0
    %789 = vmatpush2.msra.mxu0 0.0
    %790 = vmatprep.subr.mxu0 0.0
    %791 = vmatpush2.msra.mxu0 0.0
    %792 = vmatprep.subr.mxu0 0.0
    %793 = vmatpush2.msra.mxu0 0.0
    %794 = vmatprep.subr.mxu0 0.0
    %795 = vmatpush2.msra.mxu0 0.0
    %796 = vmatprep.subr.mxu0 0.0
    %797 = vmatpush2.msra.mxu0 0.0
    %798 = vmatprep.subr.mxu0 0.0
    %799 = vmatpush2.msra.mxu0 0.0
    %800 = vmatprep.subr.mxu0 0.0
    %801 = vmatpush2.msra.mxu0 0.0
    %802 = vmatprep.subr.mxu0 0.0
    %803 = vmatpush2.msra.mxu0 0.0
    %804 = vmatprep.subr.mxu0 0.0
    %805 = vmatpush2.msra.mxu0 0.0
    %806 = vmatprep.subr.mxu0 0.0
    %807 = vmatpush2.msra.mxu0 0.0
    %808 = vmatprep.mubr.f32.mxu0 0.0
    %809 = vmatmul.mubr.f32.gmra.mxu0 %v670
    %v810 = vpop.f32.mrf.mxu0
    %v811 = vadd.f32 %v667, %v810
    %v812 = vpop.f32.mrf.mxu0
    %813 = vmatprep.mubr.f32.mxu0 0.0
    %814 = vmatmul.mubr.f32.gmra.mxu0 %v673
    %v815 = vpop.f32.mrf.mxu0
    %v816 = vadd.f32 %v667, %v815
    %v817 = vpop.f32.mrf.mxu0
    %818 = vmatprep.mubr.f32.mxu0 0.0
    %819 = vmatmul.mubr.f32.gmra.mxu0 %v676
    %v820 = vpop.f32.mrf.mxu0
    %v821 = vadd.f32 %v667, %v820
    %v822 = vpop.f32.mrf.mxu0
    %823 = vmatprep.mubr.f32.mxu0 0.0
    %824 = vmatmul.mubr.f32.gmra.mxu0 %v679
    %v825 = vpop.f32.mrf.mxu0
    %v826 = vadd.f32 %v667, %v825
    %v827 = vpop.f32.mrf.mxu0
    %828 = vmatprep.mubr.f32.mxu0 0.0
    %829 = vmatmul.mubr.f32.gmra.mxu0 %v682
    %v830 = vpop.f32.mrf.mxu0
    %v831 = vadd.f32 %v667, %v830
    %v832 = vpop.f32.mrf.mxu0
    %833 = vmatprep.mubr.f32.mxu0 0.0
    %834 = vmatmul.mubr.f32.gmra.mxu0 %v685
    %v835 = vpop.f32.mrf.mxu0
    %v836 = vadd.f32 %v667, %v835
    %v837 = vpop.f32.mrf.mxu0
    %838 = vmatprep.mubr.f32.mxu0 0.0
    %839 = vmatmul.mubr.f32.gmra.mxu0 %v688
    %v840 = vpop.f32.mrf.mxu0
    %v841 = vadd.f32 %v667, %v840
    %v842 = vpop.f32.mrf.mxu0
    %843 = vmatprep.mubr.f32.mxu0 0.0
    %844 = vmatmul.mubr.f32.gmra.mxu0 %v691
    %v845 = vpop.f32.mrf.mxu0
    %v846 = vadd.f32 %v667, %v845
    %v847 = vpop.f32.mrf.mxu0
    %848 = vmatprep.mubr.f32.mxu0 0.0
    %849 = vmatmul.mubr.f32.gmra.mxu0 %v694
    %v850 = vpop.f32.mrf.mxu0
    %v851 = vadd.f32 %v667, %v850
    %v852 = vpop.f32.mrf.mxu0
    %853 = vmatprep.mubr.f32.mxu0 0.0
    %854 = vmatmul.mubr.f32.gmra.mxu0 %v697
    %v855 = vpop.f32.mrf.mxu0
    %v856 = vadd.f32 %v667, %v855
    %v857 = vpop.f32.mrf.mxu0
    %858 = vmatprep.mubr.f32.mxu0 0.0
    %859 = vmatmul.mubr.f32.gmra.mxu0 %v700
    %v860 = vpop.f32.mrf.mxu0
    %v861 = vadd.f32 %v667, %v860
    %v862 = vpop.f32.mrf.mxu0
    %863 = vmatprep.mubr.f32.mxu0 0.0
    %864 = vmatmul.mubr.f32.gmra.mxu0 %v703
    %v865 = vpop.f32.mrf.mxu0
    %v866 = vadd.f32 %v667, %v865
    %v867 = vpop.f32.mrf.mxu0
    %868 = vmatprep.mubr.f32.mxu0 0.0
    %869 = vmatmul.mubr.f32.gmra.mxu0 %v706
    %v870 = vpop.f32.mrf.mxu0
    %v871 = vadd.f32 %v667, %v870
    %v872 = vpop.f32.mrf.mxu0
    %873 = vmatprep.mubr.f32.mxu0 0.0
    %874 = vmatmul.mubr.f32.gmra.mxu0 %v709
    %v875 = vpop.f32.mrf.mxu0
    %v876 = vadd.f32 %v667, %v875
    %v877 = vpop.f32.mrf.mxu0
    %878 = vmatprep.mubr.f32.mxu0 0.0
    %879 = vmatmul.mubr.f32.gmra.mxu0 %v712
    %v880 = vpop.f32.mrf.mxu0
    %v881 = vadd.f32 %v667, %v880
    %v882 = vpop.f32.mrf.mxu0
    %883 = vmatprep.mubr.f32.mxu0 0.0
    %884 = vmatmul.mubr.f32.gmra.mxu0 %v715
    %v885 = vpop.f32.mrf.mxu0
    %v886 = vadd.f32 %v667, %v885
    %v887 = vpop.f32.mrf.mxu0
    %888 = vmatprep.mubr.f32.mxu0 0.0
    %889 = vmatmul.mubr.f32.gmra.mxu0 %v718
    %v890 = vpop.f32.mrf.mxu0
    %v891 = vadd.f32 %v667, %v890
    %v892 = vpop.f32.mrf.mxu0
    %893 = vmatprep.mubr.f32.mxu0 0.0
    %894 = vmatmul.mubr.f32.gmra.mxu0 %v721
    %v895 = vpop.f32.mrf.mxu0
    %v896 = vadd.f32 %v667, %v895
    %v897 = vpop.f32.mrf.mxu0
    %898 = vmatprep.mubr.f32.mxu0 0.0
    %899 = vmatmul.mubr.f32.gmra.mxu0 %v724
    %v900 = vpop.f32.mrf.mxu0
    %v901 = vadd.f32 %v667, %v900
    %v902 = vpop.f32.mrf.mxu0
    %903 = vmatprep.mubr.f32.mxu0 0.0
    %904 = vmatmul.mubr.f32.gmra.mxu0 %v727
    %v905 = vpop.f32.mrf.mxu0
    %v906 = vadd.f32 %v667, %v905
    %v907 = vpop.f32.mrf.mxu0
    %908 = vmatprep.mubr.f32.mxu0 0.0
    %909 = vmatmul.mubr.f32.gmra.mxu0 %v730
    %v910 = vpop.f32.mrf.mxu0
    %v911 = vadd.f32 %v667, %v910
    %v912 = vpop.f32.mrf.mxu0
    %913 = vmatprep.mubr.f32.mxu0 0.0
    %914 = vmatmul.mubr.f32.gmra.mxu0 %v733
    %v915 = vpop.f32.mrf.mxu0
    %v916 = vadd.f32 %v667, %v915
    %v917 = vpop.f32.mrf.mxu0
    %918 = vmatprep.mubr.f32.mxu0 0.0
    %919 = vmatmul.mubr.f32.gmra.mxu0 %v736
    %v920 = vpop.f32.mrf.mxu0
    %v921 = vadd.f32 %v667, %v920
    %v922 = vpop.f32.mrf.mxu0
    %923 = vmatprep.mubr.f32.mxu0 0.0
    %924 = vmatmul.mubr.f32.gmra.mxu0 %v739
    %v925 = vpop.f32.mrf.mxu0
    %v926 = vadd.f32 %v667, %v925
    %v927 = vpop.f32.mrf.mxu0
    %928 = vmatprep.mubr.f32.mxu0 0.0
    %929 = vmatmul.mubr.f32.gmra.mxu0 %v742
    %v930 = vpop.f32.mrf.mxu0
    %v931 = vadd.f32 %v667, %v930
    %v932 = vpop.f32.mrf.mxu0
    %933 = vdwg.mxu0
    %v934 = vmax.f32 %v811, 0.0
    %v935 = vmax.f32 %v816, 0.0
    %v936 = vmax.f32 %v821, 0.0
    %v937 = vmax.f32 %v826, 0.0
    %v938 = vmax.f32 %v831, 0.0
    %v939 = vmax.f32 %v836, 0.0
    %v940 = vmax.f32 %v841, 0.0
    %v941 = vmax.f32 %v846, 0.0
    %v942 = vmax.f32 %v851, 0.0
    %v943 = vmax.f32 %v856, 0.0
    %v944 = vmax.f32 %v861, 0.0
    %v945 = vmax.f32 %v866, 0.0
    %v946 = vmax.f32 %v871, 0.0
    %v947 = vmax.f32 %v876, 0.0
    %v948 = vmax.f32 %v881, 0.0
    %v949 = vmax.f32 %v886, 0.0
    %v950 = vmax.f32 %v891, 0.0
    %v951 = vmax.f32 %v896, 0.0
    %v952 = vmax.f32 %v901, 0.0
    %v953 = vmax.f32 %v906, 0.0
    %v954 = vmax.f32 %v911, 0.0
    %v955 = vmax.f32 %v916, 0.0
    %v956 = vmax.f32 %v921, 0.0
    %v957 = vmax.f32 %v926, 0.0
    %v958 = vmax.f32 %v931, 0.0
    %959 = vst [vmem:[#allocation2] sm:$0xff] %v934
    %960 = vst [vmem:[#allocation2 + $0x8] sm:$0xff] %v935
    %961 = vst [vmem:[#allocation2 + $0x10] sm:$0xff] %v936
    %962 = vst [vmem:[#allocation2 + $0x18] sm:$0xff] %v937
    %963 = vst [vmem:[#allocation2 + $0x20] sm:$0xff] %v938
    %964 = vst [vmem:[#allocation2 + $0x28] sm:$0xff] %v939
    %965 = vst [vmem:[#allocation2 + $0x30] sm:$0xff] %v940
    %966 = vst [vmem:[#allocation2 + $0x38] sm:$0xff] %v941
    %967 = vst [vmem:[#allocation2 + $0x40] sm:$0xff] %v942
    %968 = vst [vmem:[#allocation2 + $0x48] sm:$0xff] %v943
    %969 = vst [vmem:[#allocation2 + $0x50] sm:$0xff] %v944
    %970 = vst [vmem:[#allocation2 + $0x58] sm:$0xff] %v945
    %971 = vst [vmem:[#allocation2 + $0x60] sm:$0xff] %v946
    %972 = vst [vmem:[#allocation2 + $0x68] sm:$0xff] %v947
    %973 = vst [vmem:[#allocation2 + $0x70] sm:$0xff] %v948
    %974 = vst [vmem:[#allocation2 + $0x78] sm:$0xff] %v949
    %975 = vst [vmem:[#allocation2 + $0x80] sm:$0xff] %v950
    %976 = vst [vmem:[#allocation2 + $0x88] sm:$0xff] %v951
    %977 = vst [vmem:[#allocation2 + $0x90] sm:$0xff] %v952
    %978 = vst [vmem:[#allocation2 + $0x98] sm:$0xff] %v953
    %979 = vst [vmem:[#allocation2 + $0xa0] sm:$0xff] %v954
    %980 = vst [vmem:[#allocation2 + $0xa8] sm:$0xff] %v955
    %981 = vst [vmem:[#allocation2 + $0xb0] sm:$0xff] %v956
    %982 = vst [vmem:[#allocation2 + $0xb8] sm:$0xff] %v957
    %983 = vst [vmem:[#allocation2 + $0xc0] sm:$0xff] %v958
    // Predicated region
    $region30: #{tpu_custom_call.1} parent=1 // pred_check
      _
    $region31: #{tpu_custom_call.1} parent=1 // pred_check_branch
      %985 = sbr.rel (0) target = $region33
    $region32: #{tpu_custom_call.1} parent=1 // pred_region
      %s987 = ssub.s32 3200, 3200
      %988 = vsyncadd [#allocation3], %s987
      %s989 = sshll.u32 [#allocation2], 4
      %s990 = int_to_ptr.vmem [resolvable:$true] %s989
      %995 = dma.vmem_to_hbm [thread:$0]  %s990, 3200, %s7, [#allocation3], 128, 128, 8
    $region33: #{tpu_custom_call.1} parent=1 // pred_fallthru
      _
    // Predicated region
    $region34: #{tpu_custom_call.1} parent=1 // pred_check
      _
    $region35: #{tpu_custom_call.1} parent=1 // pred_check_branch
      %997 = sbr.rel (0) target = $region37
    $region36: #{tpu_custom_call.1} parent=1 // pred_region
      %998 = dma.done [#allocation3], 3200
    $region37: #{tpu_custom_call.1} parent=1 // pred_fallthru
      _
    %999 = vsyncpa [#allocation3], 1

</llo_original>
